<compile_context>
chip_gen: v7x
topology: tpu7x:2x2x1
jax: 0.10.0
libtpu: 0.0.40
codegen_flags: <defaults>
</compile_context>

<pallas_src>
import jax
import jax.numpy as jnp
from jax.experimental import pallas as pl
from jax.experimental.pallas import tpu as pltpu

_LANE = 128
_SUBLANE = 8
_MIB = 1024 * 1024


def _round_up(x, m):
    return ((x + m - 1) // m) * m


def _leaky_relu(x, negative_slope=0.01):
    # torch.nn.functional.leaky_relu default negative_slope = 0.01
    return jnp.where(x > 0, x, negative_slope * x)


def _device_kind():
    try:
        return jax.devices()[0].device_kind.lower()
    except Exception:
        return ""


def _is_v7x():
    return "v7" in _device_kind()


def _vmem_budget_bytes():
    kind = _device_kind()
    if "v7" in kind:
        return 56 * _MIB      # 64 MiB physical per TC on v7x -> leave headroom
    if "v5" in kind or "v6" in kind:
        return 100 * _MIB     # 128 MiB physical on v5e/v6e
    return 64 * _MIB          # conservative default for unknown parts


def _tile_m_candidates(batch8):
    base = [512, 256, 128, 64, 32, 16]
    if batch8 <= 512:
        return [batch8] + [c for c in base if c < batch8]
    return base


def _pick_tile_m(batch8, fits):
    cands = _tile_m_candidates(batch8)
    for c in cands:
        if fits(c):
            return c
    return cands[-1]


# ------------------------------ kernels ------------------------------------ #

def _mlp_kernel(x_ref,
                w1_ref, b1_ref,
                w2_ref, b2_ref,
                w3_ref, b3_ref,
                w4_ref, b4_ref,
                w5_ref, b5_ref,
                out_ref):
    """Fused 5-layer MLP on one (TILE_M, *) batch tile (W1 fully resident)."""
    h = jnp.dot(x_ref[...], w1_ref[...], preferred_element_type=jnp.float32)
    h = _leaky_relu(h + b1_ref[...])

    h = jnp.dot(h.astype(jnp.bfloat16), w2_ref[...],
                preferred_element_type=jnp.float32)
    h = _leaky_relu(h + b2_ref[...])

    h = jnp.dot(h.astype(jnp.bfloat16), w3_ref[...],
                preferred_element_type=jnp.float32)
    h = _leaky_relu(h + b3_ref[...])

    h = jnp.dot(h.astype(jnp.bfloat16), w4_ref[...],
                preferred_element_type=jnp.float32)
    h = _leaky_relu(h + b4_ref[...])

    h = jnp.dot(h.astype(jnp.bfloat16), w5_ref[...],
                preferred_element_type=jnp.float32)
    h = h + b5_ref[...]

    out_ref[...] = h.astype(out_ref.dtype)


def _mlp_kernel_ktiled(x_ref,
                       w1_ref, b1_ref,
                       w2_ref, b2_ref,
                       w3_ref, b3_ref,
                       w4_ref, b4_ref,
                       w5_ref, b5_ref,
                       out_ref, acc_ref):
    """Layer-1 K-tiled variant for large input_size (W1 streamed over axis k)."""
    k = pl.program_id(1)

    @pl.when(k == 0)
    def _():
        acc_ref[...] = jnp.zeros_like(acc_ref)

    acc_ref[...] += jnp.dot(x_ref[...], w1_ref[...],
                            preferred_element_type=jnp.float32)

    @pl.when(k == pl.num_programs(1) - 1)
    def _():
        h = _leaky_relu(acc_ref[...] + b1_ref[...])

        h = jnp.dot(h.astype(jnp.bfloat16), w2_ref[...],
                    preferred_element_type=jnp.float32)
        h = _leaky_relu(h + b2_ref[...])

        h = jnp.dot(h.astype(jnp.bfloat16), w3_ref[...],
                    preferred_element_type=jnp.float32)
        h = _leaky_relu(h + b3_ref[...])

        h = jnp.dot(h.astype(jnp.bfloat16), w4_ref[...],
                    preferred_element_type=jnp.float32)
        h = _leaky_relu(h + b4_ref[...])

        h = jnp.dot(h.astype(jnp.bfloat16), w5_ref[...],
                    preferred_element_type=jnp.float32)
        h = h + b5_ref[...]

        out_ref[...] = h.astype(out_ref.dtype)


# ------------------------------ wrapper ------------------------------------ #

@jax.jit
def language_net_forward(x, params):
    """x: (batch, vector_size, word_length) or (batch, input_size).

    Returns (batch, num_languages) float32, matching the PyTorch forward.
    """
    batch = x.shape[0]
    x2d = x.reshape(batch, -1).astype(jnp.float32)
    input_size = x2d.shape[1]

    (w1, b1), (w2, b2), (w3, b3), (w4, b4), (w5, b5) = params
    num_languages = w5.shape[1]

    budget = _vmem_budget_bytes()

    # ---- lane-dense padded layer widths (layout plumbing here, not in-kernel) ----
    d0 = _round_up(input_size, _LANE)       # padded input width
    d1 = d0                                  # fc1 output width == input width
    d2 = _round_up(w2.shape[1], _LANE)      # 200 -> 256
    d3 = _round_up(w3.shape[1], _LANE)      # 100 -> 128
    d4 = _round_up(w4.shape[1], _LANE)      # 50  -> 128
    d5 = _round_up(num_languages, _LANE)    # 6   -> 128

    def padw(a, rows, cols):
        return jnp.pad(a, ((0, rows - a.shape[0]), (0, cols - a.shape[1])))

    # bf16 weights (f32 MXU accumulation), f32 biases.  Zero padding keeps the
    # padded lanes exactly 0 through leaky_relu.
    w2p = padw(w2, d1, d2).astype(jnp.bfloat16)
    w3p = padw(w3, d2, d3).astype(jnp.bfloat16)
    w4p = padw(w4, d3, d4).astype(jnp.bfloat16)
    w5p = padw(w5, d4, d5).astype(jnp.bfloat16)
    b1p = padw(b1, 1, d1).astype(jnp.float32)
    b2p = padw(b2, 1, d2).astype(jnp.float32)
    b3p = padw(b3, 1, d3).astype(jnp.float32)
    b4p = padw(b4, 1, d4).astype(jnp.float32)
    b5p = padw(b5, 1, d5).astype(jnp.float32)

    f32, bf16 = 4, 2
    w1_bytes = d0 * d1 * bf16
    other_w_bytes = (d1 * d2 + d2 * d3 + d3 * d4 + d4 * d5) * bf16
    bias_bytes = (d1 + d2 + d3 + d4 + d5) * f32

    batch8 = _round_up(batch, _SUBLANE)
    use_k_tiling = w1_bytes > budget // 2

    if not use_k_tiling:
        # ------------------ W1-resident path (1-D batch grid) ------------------ #
        resident_bytes = w1_bytes + other_w_bytes + bias_bytes  # single-buffered

        def fits(tm):
            io = 2 * tm * d0 * bf16 + 2 * tm * d5 * f32   # double-buffered x/out
            act = 2 * tm * max(d1, d2) * f32              # intermediate headroom
            return (resident_bytes + io + act) * 1.25 + 2 * _MIB <= budget

        tile_m = _pick_tile_m(batch8, fits)
        # v7x: make sure the "parallel" batch axis has >=2 steps so both
        # TensorCores get work (no-op on single-TC v5e/v6e, not applied there).
        if _is_v7x() and batch8 >= 32:
            tile_m = min(tile_m, _round_up(batch8 // 2, 16))

        batch_p = _round_up(batch8, tile_m)
        grid = (batch_p // tile_m,)

        io = 2 * tile_m * d0 * bf16 + 2 * tile_m * d5 * f32
        act = 2 * tile_m * max(d1, d2) * f32
        est = int((resident_bytes + io + act) * 1.25) + 2 * _MIB
        vmem_limit = int(min(max(est, 32 * _MIB), budget))

        x_pad = padw(x2d, batch_p, d0).astype(jnp.bfloat16)
        w1p = padw(w1, d0, d1).astype(jnp.bfloat16)

        # TODO(synk): if an xprof trace shows the x-tile DMA exposed for small
        # input_size, deepen x_spec with pipeline_mode=pl.Buffered(3).
        x_spec = pl.BlockSpec((tile_m, d0), lambda i: (i, 0))
        out_spec = pl.BlockSpec((tile_m, d5), lambda i: (i, 0))

        def resident(shape):
            # Constant block index: DMA'd once, stays resident; Buffered(1)
            # disables double-buffering so it costs 1x its size in VMEM.
            return pl.BlockSpec(shape, lambda i: (0, 0),
                                pipeline_mode=pl.Buffered(1))

        in_specs = [
            x_spec,
            resident((d0, d1)), resident((1, d1)),
            resident((d1, d2)), resident((1, d2)),
            resident((d2, d3)), resident((1, d3)),
            resident((d3, d4)), resident((1, d4)),
            resident((d4, d5)), resident((1, d5)),
        ]

        out_padded = pl.pallas_call(
            _mlp_kernel,
            out_shape=jax.ShapeDtypeStruct((batch_p, d5), jnp.float32),
            grid=grid,
            in_specs=in_specs,
            out_specs=out_spec,
            compiler_params=pltpu.CompilerParams(
                dimension_semantics=("parallel",),
                vmem_limit_bytes=vmem_limit,
            ),
        )(x_pad, w1p, b1p, w2p, b2p, w3p, b3p, w4p, b4p, w5p, b5p)

    else:
        # ------------- K-tiled layer-1 path (2-D grid, W1 streamed) ------------ #
        # W1 strips of (tile_k, d1) bf16 are double-buffered; layers 2-5 stay
        # resident; a (tile_m, d1) f32 accumulator lives in VMEM scratch.
        tile_k = max(_LANE,
                     ((budget // 3) // (2 * bf16 * d1)) // _LANE * _LANE)
        tile_k = min(tile_k, d0)
        d0k = _round_up(d0, tile_k)
        other_resident = other_w_bytes + bias_bytes

        def fits(tm):
            acc = tm * d1 * f32
            io = 2 * tm * tile_k * bf16 + 2 * tm * d5 * f32
            w1_buf = 2 * tile_k * d1 * bf16
            act = 2 * tm * max(d1, d2) * f32
            return (other_resident + acc + io + w1_buf + act) * 1.25 \
                + 2 * _MIB <= budget

        tile_m = _pick_tile_m(batch8, fits)
        if _is_v7x() and batch8 >= 32:
            tile_m = min(tile_m, _round_up(batch8 // 2, 16))

        batch_p = _round_up(batch8, tile_m)
        grid = (batch_p // tile_m, d0k // tile_k)

        acc = tile_m * d1 * f32
        io = 2 * tile_m * tile_k * bf16 + 2 * tile_m * d5 * f32
        w1_buf = 2 * tile_k * d1 * bf16
        act = 2 * tile_m * max(d1, d2) * f32
        est = int((other_resident + acc + io + w1_buf + act) * 1.25) + 2 * _MIB
        vmem_limit = int(min(max(est, 32 * _MIB), budget))
        # TODO(synk): for extreme input_size where even a (128, d1) bf16 W1
        # strip overflows the budget, d1 would also need N-tiling.

        x_pad = padw(x2d, batch_p, d0k).astype(jnp.bfloat16)
        w1p = padw(w1, d0k, d1).astype(jnp.bfloat16)

        def resident(shape):
            return pl.BlockSpec(shape, lambda i, k: (0, 0),
                                pipeline_mode=pl.Buffered(1))

        in_specs = [
            pl.BlockSpec((tile_m, tile_k), lambda i, k: (i, k)),
            pl.BlockSpec((tile_k, d1), lambda i, k: (k, 0)),  # streamed W1
            resident((1, d1)),
            resident((d1, d2)), resident((1, d2)),
            resident((d2, d3)), resident((1, d3)),
            resident((d3, d4)), resident((1, d4)),
            resident((d4, d5)), resident((1, d5)),
        ]
        out_spec = pl.BlockSpec((tile_m, d5), lambda i, k: (i, 0))

        out_padded = pl.pallas_call(
            _mlp_kernel_ktiled,
            out_shape=jax.ShapeDtypeStruct((batch_p, d5), jnp.float32),
            grid=grid,
            in_specs=in_specs,
            out_specs=out_spec,
            scratch_shapes=[pltpu.VMEM((tile_m, d1), jnp.float32)],
            compiler_params=pltpu.CompilerParams(
                dimension_semantics=("parallel", "arbitrary"),
                vmem_limit_bytes=vmem_limit,
            ),
        )(x_pad, w1p, b1p, w2p, b2p, w3p, b3p, w4p, b4p, w5p, b5p)

    # Slice padded batch rows and padded language lanes back off.
    return out_padded[:batch, :num_languages]


# --------------------------- init & reference ------------------------------ #

def init_language_net_params(key, vector_size, word_length, num_languages):
    """Deterministic init mimicking nn.Linear (uniform +-1/sqrt(fan_in)).

    Weights are stored (in, out); biases stored (1, out) for 2-D VMEM layout.
    """
    input_size = vector_size * word_length
    dims = [input_size, input_size, 200, 100, 50, num_languages]
    params = []
    for i in range(5):
        fan_in, fan_out = dims[i], dims[i + 1]
        key, kw, kb = jax.random.split(key, 3)
        bound = 1.0 / jnp.sqrt(jnp.float32(fan_in))
        w = jax.random.uniform(kw, (fan_in, fan_out), jnp.float32, -bound, bound)
        b = jax.random.uniform(kb, (1, fan_out), jnp.float32, -bound, bound)
        params.append((w, b))
    return params


def reference_forward(x, params):
    """Pure-JAX f32 reference matching the PyTorch forward."""
    h = x.reshape(x.shape[0], -1).astype(jnp.float32)
    for i, (w, b) in enumerate(params):
        h = h @ w + b
        if i < 4:
            h = _leaky_relu(h)
    return h


if __name__ == "__main__":
    # Small shapes consistent with the module: input_size = vector_size * word_length
    batch = 8
    vector_size = 8
    word_length = 16
    num_languages = 6

    key = jax.random.PRNGKey(0)
    key, kx = jax.random.split(key)
    x = jax.random.normal(kx, (batch, vector_size, word_length), jnp.float32)

    params = init_language_net_params(key, vector_size, word_length, num_languages)

    out = jax.block_until_ready(language_net_forward(x, params))
    ref = reference_forward(x, params)

    assert out.shape == (batch, num_languages), out.shape
    # bf16 weights/activations on the MXU (f32 accumulation) vs. the pure-f32
    # XLA reference -> allow bf16-level tolerance.
    err = float(jnp.max(jnp.abs(out - ref)))
    assert jnp.allclose(out, ref, atol=2e-2, rtol=2e-2), f"mismatch vs ref: {err}"

    print("KERNEL_OK")
</pallas_src>

<mosaic_0001>
module attributes {stable_mosaic.version = 11 : i64} {
  func.func @_mlp_kernel(%arg0: i32, %arg1: memref<8x128xbf16, #tpu.memory_space<vmem>>, %arg2: memref<128x128xbf16, #tpu.memory_space<vmem>>, %arg3: memref<1x128xf32, #tpu.memory_space<vmem>>, %arg4: memref<128x256xbf16, #tpu.memory_space<vmem>>, %arg5: memref<1x256xf32, #tpu.memory_space<vmem>>, %arg6: memref<256x128xbf16, #tpu.memory_space<vmem>>, %arg7: memref<1x128xf32, #tpu.memory_space<vmem>>, %arg8: memref<128x128xbf16, #tpu.memory_space<vmem>>, %arg9: memref<1x128xf32, #tpu.memory_space<vmem>>, %arg10: memref<128x128xbf16, #tpu.memory_space<vmem>>, %arg11: memref<1x128xf32, #tpu.memory_space<vmem>>, %arg12: memref<8x128xf32, #tpu.memory_space<vmem>>) attributes {dimension_semantics = [#tpu.dimension_semantics<parallel>], iteration_bounds = array<i64: 1>, scalar_prefetch = 0 : i64, scratch_operands = 0 : i64, tpu.core_type = #tpu.core_type<tc>, window_params = [{transform_indices = @transform_0, window_bounds = array<i64: 8, 128>}, {pipeline_mode = #tpu.pipeline_mode<synchronous>, transform_indices = @transform_1, window_bounds = array<i64: 128, 128>}, {pipeline_mode = #tpu.pipeline_mode<synchronous>, transform_indices = @transform_2, window_bounds = array<i64: 1, 128>}, {pipeline_mode = #tpu.pipeline_mode<synchronous>, transform_indices = @transform_3, window_bounds = array<i64: 128, 256>}, {pipeline_mode = #tpu.pipeline_mode<synchronous>, transform_indices = @transform_4, window_bounds = array<i64: 1, 256>}, {pipeline_mode = #tpu.pipeline_mode<synchronous>, transform_indices = @transform_5, window_bounds = array<i64: 256, 128>}, {pipeline_mode = #tpu.pipeline_mode<synchronous>, transform_indices = @transform_6, window_bounds = array<i64: 1, 128>}, {pipeline_mode = #tpu.pipeline_mode<synchronous>, transform_indices = @transform_7, window_bounds = array<i64: 128, 128>}, {pipeline_mode = #tpu.pipeline_mode<synchronous>, transform_indices = @transform_8, window_bounds = array<i64: 1, 128>}, {pipeline_mode = #tpu.pipeline_mode<synchronous>, transform_indices = @transform_9, window_bounds = array<i64: 128, 128>}, {pipeline_mode = #tpu.pipeline_mode<synchronous>, transform_indices = @transform_10, window_bounds = array<i64: 1, 128>}, {transform_indices = @transform_11, window_bounds = array<i64: 8, 128>}]} {
    %c0 = arith.constant 0 : index
    %c0_0 = arith.constant 0 : index
    %0 = vector.load %arg1[%c0, %c0_0] : memref<8x128xbf16, #tpu.memory_space<vmem>>, vector<8x128xbf16>
    %c0_1 = arith.constant 0 : index
    %c0_2 = arith.constant 0 : index
    %1 = vector.load %arg2[%c0_1, %c0_2] : memref<128x128xbf16, #tpu.memory_space<vmem>>, vector<128x128xbf16>
    %cst = arith.constant dense<0.000000e+00> : vector<8x128xf32>
    %2 = tpu.matmul %0, %1, %cst {dimension_numbers = #tpu.dot_dimension_numbers<[1], [0], [0], [1], [0, 0, 1, 1], [], []>} : vector<8x128xbf16>, vector<128x128xbf16>, vector<8x128xf32> -> vector<8x128xf32>
    %c0_3 = arith.constant 0 : index
    %c0_4 = arith.constant 0 : index
    %3 = vector.load %arg3[%c0_3, %c0_4] : memref<1x128xf32, #tpu.memory_space<vmem>>, vector<1x128xf32>
    %4 = vector.broadcast %3 : vector<1x128xf32> to vector<8x128xf32>
    %5 = arith.addf %2, %4 : vector<8x128xf32>
    %cst_5 = arith.constant 0.000000e+00 : f32
    %6 = vector.broadcast %cst_5 : f32 to vector<8x128xf32>
    %7 = arith.cmpf ogt, %5, %6 : vector<8x128xf32>
    %cst_6 = arith.constant 0.00999999977 : f32
    %8 = vector.broadcast %cst_6 : f32 to vector<8x128xf32>
    %9 = arith.mulf %8, %5 : vector<8x128xf32>
    %10 = arith.select %7, %5, %9 : vector<8x128xi1>, vector<8x128xf32>
    %11 = arith.truncf %10 : vector<8x128xf32> to vector<8x128xbf16>
    %c0_7 = arith.constant 0 : index
    %c0_8 = arith.constant 0 : index
    %12 = vector.load %arg4[%c0_7, %c0_8] : memref<128x256xbf16, #tpu.memory_space<vmem>>, vector<128x256xbf16>
    %cst_9 = arith.constant dense<0.000000e+00> : vector<8x256xf32>
    %13 = tpu.matmul %11, %12, %cst_9 {dimension_numbers = #tpu.dot_dimension_numbers<[1], [0], [0], [1], [0, 0, 1, 1], [], []>} : vector<8x128xbf16>, vector<128x256xbf16>, vector<8x256xf32> -> vector<8x256xf32>
    %c0_10 = arith.constant 0 : index
    %c0_11 = arith.constant 0 : index
    %14 = vector.load %arg5[%c0_10, %c0_11] : memref<1x256xf32, #tpu.memory_space<vmem>>, vector<1x256xf32>
    %15 = vector.broadcast %14 : vector<1x256xf32> to vector<8x256xf32>
    %16 = arith.addf %13, %15 : vector<8x256xf32>
    %cst_12 = arith.constant 0.000000e+00 : f32
    %17 = vector.broadcast %cst_12 : f32 to vector<8x256xf32>
    %18 = arith.cmpf ogt, %16, %17 : vector<8x256xf32>
    %cst_13 = arith.constant 0.00999999977 : f32
    %19 = vector.broadcast %cst_13 : f32 to vector<8x256xf32>
    %20 = arith.mulf %19, %16 : vector<8x256xf32>
    %21 = arith.select %18, %16, %20 : vector<8x256xi1>, vector<8x256xf32>
    %22 = arith.truncf %21 : vector<8x256xf32> to vector<8x256xbf16>
    %c0_14 = arith.constant 0 : index
    %c0_15 = arith.constant 0 : index
    %23 = vector.load %arg6[%c0_14, %c0_15] : memref<256x128xbf16, #tpu.memory_space<vmem>>, vector<256x128xbf16>
    %cst_16 = arith.constant dense<0.000000e+00> : vector<8x128xf32>
    %24 = tpu.matmul %22, %23, %cst_16 {dimension_numbers = #tpu.dot_dimension_numbers<[1], [0], [0], [1], [0, 0, 1, 1], [], []>} : vector<8x256xbf16>, vector<256x128xbf16>, vector<8x128xf32> -> vector<8x128xf32>
    %c0_17 = arith.constant 0 : index
    %c0_18 = arith.constant 0 : index
    %25 = vector.load %arg7[%c0_17, %c0_18] : memref<1x128xf32, #tpu.memory_space<vmem>>, vector<1x128xf32>
    %26 = vector.broadcast %25 : vector<1x128xf32> to vector<8x128xf32>
    %27 = arith.addf %24, %26 : vector<8x128xf32>
    %cst_19 = arith.constant 0.000000e+00 : f32
    %28 = vector.broadcast %cst_19 : f32 to vector<8x128xf32>
    %29 = arith.cmpf ogt, %27, %28 : vector<8x128xf32>
    %cst_20 = arith.constant 0.00999999977 : f32
    %30 = vector.broadcast %cst_20 : f32 to vector<8x128xf32>
    %31 = arith.mulf %30, %27 : vector<8x128xf32>
    %32 = arith.select %29, %27, %31 : vector<8x128xi1>, vector<8x128xf32>
    %33 = arith.truncf %32 : vector<8x128xf32> to vector<8x128xbf16>
    %c0_21 = arith.constant 0 : index
    %c0_22 = arith.constant 0 : index
    %34 = vector.load %arg8[%c0_21, %c0_22] : memref<128x128xbf16, #tpu.memory_space<vmem>>, vector<128x128xbf16>
    %cst_23 = arith.constant dense<0.000000e+00> : vector<8x128xf32>
    %35 = tpu.matmul %33, %34, %cst_23 {dimension_numbers = #tpu.dot_dimension_numbers<[1], [0], [0], [1], [0, 0, 1, 1], [], []>} : vector<8x128xbf16>, vector<128x128xbf16>, vector<8x128xf32> -> vector<8x128xf32>
    %c0_24 = arith.constant 0 : index
    %c0_25 = arith.constant 0 : index
    %36 = vector.load %arg9[%c0_24, %c0_25] : memref<1x128xf32, #tpu.memory_space<vmem>>, vector<1x128xf32>
    %37 = vector.broadcast %36 : vector<1x128xf32> to vector<8x128xf32>
    %38 = arith.addf %35, %37 : vector<8x128xf32>
    %cst_26 = arith.constant 0.000000e+00 : f32
    %39 = vector.broadcast %cst_26 : f32 to vector<8x128xf32>
    %40 = arith.cmpf ogt, %38, %39 : vector<8x128xf32>
    %cst_27 = arith.constant 0.00999999977 : f32
    %41 = vector.broadcast %cst_27 : f32 to vector<8x128xf32>
    %42 = arith.mulf %41, %38 : vector<8x128xf32>
    %43 = arith.select %40, %38, %42 : vector<8x128xi1>, vector<8x128xf32>
    %44 = arith.truncf %43 : vector<8x128xf32> to vector<8x128xbf16>
    %c0_28 = arith.constant 0 : index
    %c0_29 = arith.constant 0 : index
    %45 = vector.load %arg10[%c0_28, %c0_29] : memref<128x128xbf16, #tpu.memory_space<vmem>>, vector<128x128xbf16>
    %cst_30 = arith.constant dense<0.000000e+00> : vector<8x128xf32>
    %46 = tpu.matmul %44, %45, %cst_30 {dimension_numbers = #tpu.dot_dimension_numbers<[1], [0], [0], [1], [0, 0, 1, 1], [], []>} : vector<8x128xbf16>, vector<128x128xbf16>, vector<8x128xf32> -> vector<8x128xf32>
    %c0_31 = arith.constant 0 : index
    %c0_32 = arith.constant 0 : index
    %47 = vector.load %arg11[%c0_31, %c0_32] : memref<1x128xf32, #tpu.memory_space<vmem>>, vector<1x128xf32>
    %48 = vector.broadcast %47 : vector<1x128xf32> to vector<8x128xf32>
    %49 = arith.addf %46, %48 : vector<8x128xf32>
    %c0_33 = arith.constant 0 : index
    %c0_34 = arith.constant 0 : index
    %50 = vector.load %arg12[%c0_33, %c0_34] : memref<8x128xf32, #tpu.memory_space<vmem>>, vector<8x128xf32>
    tpu.vector_store %arg12[%c0_33, %c0_34], %49 {strides = array<i32>} : memref<8x128xf32, #tpu.memory_space<vmem>>, vector<8x128xf32>,
    return
  }
  func.func @transform_0(%arg0: i32) -> (i32, i32) {
    %c0_i32 = arith.constant 0 : i32
    %c0_i32_0 = arith.constant 0 : i32
    return %arg0, %c0_i32 : i32, i32
  }
  func.func @transform_1(%arg0: i32) -> (i32, i32) {
    %c0_i32 = arith.constant 0 : i32
    %c0_i32_0 = arith.constant 0 : i32
    %c0_i32_1 = arith.constant 0 : i32
    return %c0_i32, %c0_i32_0 : i32, i32
  }
  func.func @transform_2(%arg0: i32) -> (i32, i32) {
    %c0_i32 = arith.constant 0 : i32
    %c0_i32_0 = arith.constant 0 : i32
    %c0_i32_1 = arith.constant 0 : i32
    return %c0_i32, %c0_i32_0 : i32, i32
  }
  func.func @transform_3(%arg0: i32) -> (i32, i32) {
    %c0_i32 = arith.constant 0 : i32
    %c0_i32_0 = arith.constant 0 : i32
    %c0_i32_1 = arith.constant 0 : i32
    return %c0_i32, %c0_i32_0 : i32, i32
  }
  func.func @transform_4(%arg0: i32) -> (i32, i32) {
    %c0_i32 = arith.constant 0 : i32
    %c0_i32_0 = arith.constant 0 : i32
    %c0_i32_1 = arith.constant 0 : i32
    return %c0_i32, %c0_i32_0 : i32, i32
  }
  func.func @transform_5(%arg0: i32) -> (i32, i32) {
    %c0_i32 = arith.constant 0 : i32
    %c0_i32_0 = arith.constant 0 : i32
    %c0_i32_1 = arith.constant 0 : i32
    return %c0_i32, %c0_i32_0 : i32, i32
  }
  func.func @transform_6(%arg0: i32) -> (i32, i32) {
    %c0_i32 = arith.constant 0 : i32
    %c0_i32_0 = arith.constant 0 : i32
    %c0_i32_1 = arith.constant 0 : i32
    return %c0_i32, %c0_i32_0 : i32, i32
  }
  func.func @transform_7(%arg0: i32) -> (i32, i32) {
    %c0_i32 = arith.constant 0 : i32
    %c0_i32_0 = arith.constant 0 : i32
    %c0_i32_1 = arith.constant 0 : i32
    return %c0_i32, %c0_i32_0 : i32, i32
  }
  func.func @transform_8(%arg0: i32) -> (i32, i32) {
    %c0_i32 = arith.constant 0 : i32
    %c0_i32_0 = arith.constant 0 : i32
    %c0_i32_1 = arith.constant 0 : i32
    return %c0_i32, %c0_i32_0 : i32, i32
  }
  func.func @transform_9(%arg0: i32) -> (i32, i32) {
    %c0_i32 = arith.constant 0 : i32
    %c0_i32_0 = arith.constant 0 : i32
    %c0_i32_1 = arith.constant 0 : i32
    return %c0_i32, %c0_i32_0 : i32, i32
  }
  func.func @transform_10(%arg0: i32) -> (i32, i32) {
    %c0_i32 = arith.constant 0 : i32
    %c0_i32_0 = arith.constant 0 : i32
    %c0_i32_1 = arith.constant 0 : i32
    return %c0_i32, %c0_i32_0 : i32, i32
  }
  func.func @transform_11(%arg0: i32) -> (i32, i32) {
    %c0_i32 = arith.constant 0 : i32
    %c0_i32_0 = arith.constant 0 : i32
    return %arg0, %c0_i32 : i32, i32
  }
}

</mosaic_0001>

<llo_original>
// kernel: language_net_forward.1
$region0: #{language_net_forward.1}
  #allocation0 [shape = 'u32[]', space=smem, size = 0x4, offset = 0x4, fixed_abs, tag = 'smem constant byte address 0x4 - core index']
  #allocation1 [shape = 'u32[144,128]{1,0:T(1,128)}', space=vmem, size = 0x12000, scoped, tag = 'internal scratch']
  %s0 = inlined_call_operand.vmem [shape: bf16[8,128], index: 0, kind: input, shape index: {}]
  %s1 = inlined_call_operand.vmem [shape: bf16[128,128], index: 1, kind: input, shape index: {}]
  %s2 = inlined_call_operand.vmem [shape: f32[1,128], index: 2, kind: input, shape index: {}]
  %s3 = inlined_call_operand.vmem [shape: bf16[128,256], index: 3, kind: input, shape index: {}]
  %s4 = inlined_call_operand.vmem [shape: f32[1,256], index: 4, kind: input, shape index: {}]
  %s5 = inlined_call_operand.vmem [shape: bf16[256,128], index: 5, kind: input, shape index: {}]
  %s6 = inlined_call_operand.vmem [shape: f32[1,128], index: 6, kind: input, shape index: {}]
  %s7 = inlined_call_operand.vmem [shape: bf16[128,128], index: 7, kind: input, shape index: {}]
  %s8 = inlined_call_operand.vmem [shape: f32[1,128], index: 8, kind: input, shape index: {}]
  %s9 = inlined_call_operand.vmem [shape: bf16[128,128], index: 9, kind: input, shape index: {}]
  %s10 = inlined_call_operand.vmem [shape: f32[1,128], index: 10, kind: input, shape index: {}]
  %s11 = inlined_call_operand.hbm [shape: f32[8,128], index: 11, kind: output, shape index: {}]
  %s12 = sld [smem:[#allocation0]]
  $region54: #{language_net_forward.1} parent=0
    _
  %s14 = ssub.s32 1, %s12
  %s15 = scalar_select 0, %s14, %s12
  $region1: #{language_net_forward.1} parent=0
    #allocation2 [shape = 'u8[4096]{0}', space=vmem, size = 0x1000, scoped, tag = 'output window, operand 0, single buffered']
    #allocation3 [shape = 's32[1]{0}', space=sflag, size = 0x4, scoped, tag = 'scoped memory for language_net_forward.1']
    %16 = vsyncpa [#allocation3], 0
    // Predicated region
    $region2: #{language_net_forward.1} parent=1 // pred_check
      _
    $region3: #{language_net_forward.1} parent=1 // pred_check_branch
      %18 = sbr.rel (0) target = $region5
    $region4: #{language_net_forward.1} parent=1 // pred_region
      _
    $region5: #{language_net_forward.1} parent=1 // pred_fallthru
      _
    // Predicated region
    $region6: #{language_net_forward.1} parent=1 // pred_check
      _
    $region7: #{language_net_forward.1} parent=1 // pred_check_branch
      %20 = sbr.rel (0) target = $region9
    $region8: #{language_net_forward.1} parent=1 // pred_region
      _
    $region9: #{language_net_forward.1} parent=1 // pred_fallthru
      _
    // Predicated region
    $region10: #{language_net_forward.1} parent=1 // pred_check
      _
    $region11: #{language_net_forward.1} parent=1 // pred_check_branch
      %22 = sbr.rel (0) target = $region13
    $region12: #{language_net_forward.1} parent=1 // pred_region
      _
    $region13: #{language_net_forward.1} parent=1 // pred_fallthru
      _
    // Predicated region
    $region14: #{language_net_forward.1} parent=1 // pred_check
      _
    $region15: #{language_net_forward.1} parent=1 // pred_check_branch
      %24 = sbr.rel (0) target = $region17
    $region16: #{language_net_forward.1} parent=1 // pred_region
      _
    $region17: #{language_net_forward.1} parent=1 // pred_fallthru
      _
    // Predicated region
    $region18: #{language_net_forward.1} parent=1 // pred_check
      _
    $region19: #{language_net_forward.1} parent=1 // pred_check_branch
      %26 = sbr.rel (0) target = $region21
    $region20: #{language_net_forward.1} parent=1 // pred_region
      _
    $region21: #{language_net_forward.1} parent=1 // pred_fallthru
      _
    // Predicated region
    $region22: #{language_net_forward.1} parent=1 // pred_check
      _
    $region23: #{language_net_forward.1} parent=1 // pred_check_branch
      %28 = sbr.rel (0) target = $region25
    $region24: #{language_net_forward.1} parent=1 // pred_region
      _
    $region25: #{language_net_forward.1} parent=1 // pred_fallthru
      _
    // Predicated region
    $region26: #{language_net_forward.1} parent=1 // pred_check
      _
    $region27: #{language_net_forward.1} parent=1 // pred_check_branch
      %30 = sbr.rel (0) target = $region29
    $region28: #{language_net_forward.1} parent=1 // pred_region
      _
    $region29: #{language_net_forward.1} parent=1 // pred_fallthru
      _
    // Predicated region
    $region30: #{language_net_forward.1} parent=1 // pred_check
      _
    $region31: #{language_net_forward.1} parent=1 // pred_check_branch
      %32 = sbr.rel (0) target = $region33
    $region32: #{language_net_forward.1} parent=1 // pred_region
      _
    $region33: #{language_net_forward.1} parent=1 // pred_fallthru
      _
    // Predicated region
    $region34: #{language_net_forward.1} parent=1 // pred_check
      _
    $region35: #{language_net_forward.1} parent=1 // pred_check_branch
      %34 = sbr.rel (0) target = $region37
    $region36: #{language_net_forward.1} parent=1 // pred_region
      _
    $region37: #{language_net_forward.1} parent=1 // pred_fallthru
      _
    // Predicated region
    $region38: #{language_net_forward.1} parent=1 // pred_check
      _
    $region39: #{language_net_forward.1} parent=1 // pred_check_branch
      %36 = sbr.rel (0) target = $region41
    $region40: #{language_net_forward.1} parent=1 // pred_region
      _
    $region41: #{language_net_forward.1} parent=1 // pred_fallthru
      _
    // Predicated region
    $region42: #{language_net_forward.1} parent=1 // pred_check
      _
    $region43: #{language_net_forward.1} parent=1 // pred_check_branch
      %38 = sbr.rel (0) target = $region45
    $region44: #{language_net_forward.1} parent=1 // pred_region
      _
    $region45: #{language_net_forward.1} parent=1 // pred_fallthru
      _
    %v40 = vld [vmem:[%s0] sm:$0xf]
    %v41 = vld [vmem:[%s1] sm:$0xf]
    %v42 = vld [vmem:[%s1 + $0x4] sm:$0xf]
    %v43 = vld [vmem:[%s1 + $0x8] sm:$0xf]
    %v44 = vld [vmem:[%s1 + $0xc] sm:$0xf]
    %v45 = vld [vmem:[%s1 + $0x10] sm:$0xf]
    %v46 = vld [vmem:[%s1 + $0x14] sm:$0xf]
    %v47 = vld [vmem:[%s1 + $0x18] sm:$0xf]
    %v48 = vld [vmem:[%s1 + $0x1c] sm:$0xf]
    %v49 = vld [vmem:[%s1 + $0x20] sm:$0xf]
    %v50 = vld [vmem:[%s1 + $0x24] sm:$0xf]
    %v51 = vld [vmem:[%s1 + $0x28] sm:$0xf]
    %v52 = vld [vmem:[%s1 + $0x2c] sm:$0xf]
    %v53 = vld [vmem:[%s1 + $0x30] sm:$0xf]
    %v54 = vld [vmem:[%s1 + $0x34] sm:$0xf]
    %v55 = vld [vmem:[%s1 + $0x38] sm:$0xf]
    %v56 = vld [vmem:[%s1 + $0x3c] sm:$0xf]
    %v57 = vld [vmem:[%s2] sm:$0x1]
    %v59 = vlaneseq
    %v60 = vshrl.u32 %v59, 7
    %v61 = vsub.s32 0, %v60
    %v62 = vrot.slane %v57, %v61
    %v80 = vunpack.c.l.b16 %v41
    %v81 = vunpack.c.l.b16 %v42
    %v82 = vunpack.c.l.b16 %v43
    %v83 = vunpack.c.l.b16 %v44
    %v84 = vunpack.c.l.b16 %v45
    %v85 = vunpack.c.l.b16 %v46
    %v86 = vunpack.c.l.b16 %v47
    %v87 = vunpack.c.l.b16 %v48
    %v88 = vunpack.c.l.b16 %v49
    %v89 = vunpack.c.l.b16 %v50
    %v90 = vunpack.c.l.b16 %v51
    %v91 = vunpack.c.l.b16 %v52
    %v92 = vunpack.c.l.b16 %v53
    %v93 = vunpack.c.l.b16 %v54
    %v94 = vunpack.c.l.b16 %v55
    %v95 = vunpack.c.l.b16 %v56
    %v96 = vpack.c.b16 %v81, %v80
    %v97 = vpack.c.b16 %v83, %v82
    %v98 = vpack.c.b16 %v85, %v84
    %v99 = vpack.c.b16 %v87, %v86
    %v100 = vpack.c.b16 %v89, %v88
    %v101 = vpack.c.b16 %v91, %v90
    %v102 = vpack.c.b16 %v93, %v92
    %v103 = vpack.c.b16 %v95, %v94
    %112 = vmatprep.subr.bf16.mxu0 0
    %113 = vmatpush1.bf16.msra.mxu0 %v96
    %114 = vmatprep.subr.bf16.mxu0 0
    %115 = vmatpush1.bf16.msra.mxu0 %v97
    %116 = vmatprep.subr.bf16.mxu0 0
    %117 = vmatpush1.bf16.msra.mxu0 %v98
    %118 = vmatprep.subr.bf16.mxu0 0
    %119 = vmatpush1.bf16.msra.mxu0 %v99
    %120 = vmatprep.subr.bf16.mxu0 0
    %121 = vmatpush1.bf16.msra.mxu0 %v100
    %122 = vmatprep.subr.bf16.mxu0 0
    %123 = vmatpush1.bf16.msra.mxu0 %v101
    %124 = vmatprep.subr.bf16.mxu0 0
    %125 = vmatpush1.bf16.msra.mxu0 %v102
    %126 = vmatprep.subr.bf16.mxu0 0
    %127 = vmatpush1.bf16.msra.mxu0 %v103
    %128 = vmatprep.subr.bf16.mxu0 0
    %129 = vmatpush1.bf16.msra.mxu0 0
    %130 = vmatprep.subr.bf16.mxu0 0
    %131 = vmatpush1.bf16.msra.mxu0 0
    %132 = vmatprep.subr.bf16.mxu0 0
    %133 = vmatpush1.bf16.msra.mxu0 0
    %134 = vmatprep.subr.bf16.mxu0 0
    %135 = vmatpush1.bf16.msra.mxu0 0
    %136 = vmatprep.subr.bf16.mxu0 0
    %137 = vmatpush1.bf16.msra.mxu0 0
    %138 = vmatprep.subr.bf16.mxu0 0
    %139 = vmatpush1.bf16.msra.mxu0 0
    %140 = vmatprep.subr.bf16.mxu0 0
    %141 = vmatpush1.bf16.msra.mxu0 0
    %142 = vmatprep.subr.bf16.mxu0 0
    %143 = vmatpush1.bf16.msra.mxu0 0
    %144 = vmatprep.mubr.bf16.mxu0 0
    %145 = vmatmul.mubr.bf16.gmra.mrb[0].mxu0 %v40
    %v146 = vpop.f32.mrb[0].mxu0
    %v147 = vadd.f32 %v62, %v146
    %v148 = vpop.f32.mrb[0].mxu0
    %v149 = vpop.f32.mrb[0].mxu0
    %v150 = vpop.f32.mrb[0].mxu0
    %151 = vdwg.mxu0
    %vm152 = vcmp.gt.f32.partialorder %v147, 0.0
    %v153 = vmul.f32 %v147, 0.01
    %v154 = vsel %vm152, %v147, %v153
    %v155 = vpack.c.bf16 %v154, %v154
    %v156 = vld [vmem:[%s3] sm:$0xff]
    %v157 = vld [vmem:[%s3 + $0x8] sm:$0xff]
    %v158 = vld [vmem:[%s3 + $0x10] sm:$0xff]
    %v159 = vld [vmem:[%s3 + $0x18] sm:$0xff]
    %v160 = vld [vmem:[%s3 + $0x20] sm:$0xff]
    %v161 = vld [vmem:[%s3 + $0x28] sm:$0xff]
    %v162 = vld [vmem:[%s3 + $0x30] sm:$0xff]
    %v163 = vld [vmem:[%s3 + $0x38] sm:$0xff]
    %v164 = vld [vmem:[%s3 + $0x40] sm:$0xff]
    %v165 = vld [vmem:[%s3 + $0x48] sm:$0xff]
    %v166 = vld [vmem:[%s3 + $0x50] sm:$0xff]
    %v167 = vld [vmem:[%s3 + $0x58] sm:$0xff]
    %v168 = vld [vmem:[%s3 + $0x60] sm:$0xff]
    %v169 = vld [vmem:[%s3 + $0x68] sm:$0xff]
    %v170 = vld [vmem:[%s3 + $0x70] sm:$0xff]
    %v171 = vld [vmem:[%s3 + $0x78] sm:$0xff]
    %v172 = vld [vmem:[%s4] sm:$0x3]
    %v174 = vlaneseq
    %v175 = vshrl.u32 %v174, 7
    %v176 = vsub.s32 0, %v175
    %v177 = vrot.slane %v172, %v176
    %v178 = vlaneseq
    %v179 = vshrl.u32 %v178, 7
    %v180 = vsub.s32 1, %v179
    %v181 = vrot.slane %v172, %v180
    %v200 = vunpack.c.l.b16 %v156
    %v201 = vunpack.c.h.b16 %v156
    %v202 = vunpack.c.l.b16 %v157
    %v203 = vunpack.c.h.b16 %v157
    %v204 = vunpack.c.l.b16 %v158
    %v205 = vunpack.c.h.b16 %v158
    %v206 = vunpack.c.l.b16 %v159
    %v207 = vunpack.c.h.b16 %v159
    %v208 = vunpack.c.l.b16 %v160
    %v209 = vunpack.c.h.b16 %v160
    %v210 = vunpack.c.l.b16 %v161
    %v211 = vunpack.c.h.b16 %v161
    %v212 = vunpack.c.l.b16 %v162
    %v213 = vunpack.c.h.b16 %v162
    %v214 = vunpack.c.l.b16 %v163
    %v215 = vunpack.c.h.b16 %v163
    %v216 = vunpack.c.l.b16 %v164
    %v217 = vunpack.c.h.b16 %v164
    %v218 = vunpack.c.l.b16 %v165
    %v219 = vunpack.c.h.b16 %v165
    %v220 = vunpack.c.l.b16 %v166
    %v221 = vunpack.c.h.b16 %v166
    %v222 = vunpack.c.l.b16 %v167
    %v223 = vunpack.c.h.b16 %v167
    %v224 = vunpack.c.l.b16 %v168
    %v225 = vunpack.c.h.b16 %v168
    %v226 = vunpack.c.l.b16 %v169
    %v227 = vunpack.c.h.b16 %v169
    %v228 = vunpack.c.l.b16 %v170
    %v229 = vunpack.c.h.b16 %v170
    %v230 = vunpack.c.l.b16 %v171
    %v231 = vunpack.c.h.b16 %v171
    %v232 = vpack.c.b16 %v202, %v200
    %v233 = vpack.c.b16 %v203, %v201
    %v234 = vpack.c.b16 %v206, %v204
    %v235 = vpack.c.b16 %v207, %v205
    %v236 = vpack.c.b16 %v210, %v208
    %v237 = vpack.c.b16 %v211, %v209
    %v238 = vpack.c.b16 %v214, %v212
    %v239 = vpack.c.b16 %v215, %v213
    %v240 = vpack.c.b16 %v218, %v216
    %v241 = vpack.c.b16 %v219, %v217
    %v242 = vpack.c.b16 %v222, %v220
    %v243 = vpack.c.b16 %v223, %v221
    %v244 = vpack.c.b16 %v226, %v224
    %v245 = vpack.c.b16 %v227, %v225
    %v246 = vpack.c.b16 %v230, %v228
    %v247 = vpack.c.b16 %v231, %v229
    %264 = vmatprep.subr.bf16.mxu0 %v233
    %265 = vmatpush1.bf16.msra.mxu0 %v232
    %266 = vmatprep.subr.bf16.mxu0 %v235
    %267 = vmatpush1.bf16.msra.mxu0 %v234
    %268 = vmatprep.subr.bf16.mxu0 %v237
    %269 = vmatpush1.bf16.msra.mxu0 %v236
    %270 = vmatprep.subr.bf16.mxu0 %v239
    %271 = vmatpush1.bf16.msra.mxu0 %v238
    %272 = vmatprep.subr.bf16.mxu0 %v241
    %273 = vmatpush1.bf16.msra.mxu0 %v240
    %274 = vmatprep.subr.bf16.mxu0 %v243
    %275 = vmatpush1.bf16.msra.mxu0 %v242
    %276 = vmatprep.subr.bf16.mxu0 %v245
    %277 = vmatpush1.bf16.msra.mxu0 %v244
    %278 = vmatprep.subr.bf16.mxu0 %v247
    %279 = vmatpush1.bf16.msra.mxu0 %v246
    %280 = vmatprep.subr.bf16.mxu0 0
    %281 = vmatpush1.bf16.msra.mxu0 0
    %282 = vmatprep.subr.bf16.mxu0 0
    %283 = vmatpush1.bf16.msra.mxu0 0
    %284 = vmatprep.subr.bf16.mxu0 0
    %285 = vmatpush1.bf16.msra.mxu0 0
    %286 = vmatprep.subr.bf16.mxu0 0
    %287 = vmatpush1.bf16.msra.mxu0 0
    %288 = vmatprep.subr.bf16.mxu0 0
    %289 = vmatpush1.bf16.msra.mxu0 0
    %290 = vmatprep.subr.bf16.mxu0 0
    %291 = vmatpush1.bf16.msra.mxu0 0
    %292 = vmatprep.subr.bf16.mxu0 0
    %293 = vmatpush1.bf16.msra.mxu0 0
    %294 = vmatprep.subr.bf16.mxu0 0
    %295 = vmatpush1.bf16.msra.mxu0 0
    %296 = vmatprep.mubr.bf16.mxu0 0
    %297 = vmatmul.mubr.bf16.gmra.mrb[0].mxu0 %v155
    %v298 = vpop.f32.mrb[0].mxu0
    %v299 = vadd.f32 %v177, %v298
    %v300 = vpop.f32.mrb[0].mxu0
    %v301 = vadd.f32 %v181, %v300
    %v302 = vpop.f32.mrb[0].mxu0
    %v303 = vpop.f32.mrb[0].mxu0
    %304 = vdwg.mxu0
    %vm305 = vcmp.gt.f32.partialorder %v299, 0.0
    %vm306 = vcmp.gt.f32.partialorder %v301, 0.0
    %v307 = vmul.f32 %v299, 0.01
    %v308 = vmul.f32 %v301, 0.01
    %v309 = vsel %vm305, %v299, %v307
    %v310 = vsel %vm306, %v301, %v308
    %v311 = vpack.c.bf16 %v309, %v309
    %v312 = vpack.c.bf16 %v310, %v310
    %v313 = vld [vmem:[%s5] sm:$0xf]
    %v314 = vld [vmem:[%s5 + $0x4] sm:$0xf]
    %v315 = vld [vmem:[%s5 + $0x8] sm:$0xf]
    %v316 = vld [vmem:[%s5 + $0xc] sm:$0xf]
    %v317 = vld [vmem:[%s5 + $0x10] sm:$0xf]
    %v318 = vld [vmem:[%s5 + $0x14] sm:$0xf]
    %v319 = vld [vmem:[%s5 + $0x18] sm:$0xf]
    %v320 = vld [vmem:[%s5 + $0x1c] sm:$0xf]
    %v321 = vld [vmem:[%s5 + $0x20] sm:$0xf]
    %v322 = vld [vmem:[%s5 + $0x24] sm:$0xf]
    %v323 = vld [vmem:[%s5 + $0x28] sm:$0xf]
    %v324 = vld [vmem:[%s5 + $0x2c] sm:$0xf]
    %v325 = vld [vmem:[%s5 + $0x30] sm:$0xf]
    %v326 = vld [vmem:[%s5 + $0x34] sm:$0xf]
    %v327 = vld [vmem:[%s5 + $0x38] sm:$0xf]
    %v328 = vld [vmem:[%s5 + $0x3c] sm:$0xf]
    %v329 = vld [vmem:[%s5 + $0x40] sm:$0xf]
    %v330 = vld [vmem:[%s5 + $0x44] sm:$0xf]
    %v331 = vld [vmem:[%s5 + $0x48] sm:$0xf]
    %v332 = vld [vmem:[%s5 + $0x4c] sm:$0xf]
    %v333 = vld [vmem:[%s5 + $0x50] sm:$0xf]
    %v334 = vld [vmem:[%s5 + $0x54] sm:$0xf]
    %v335 = vld [vmem:[%s5 + $0x58] sm:$0xf]
    %v336 = vld [vmem:[%s5 + $0x5c] sm:$0xf]
    %v337 = vld [vmem:[%s5 + $0x60] sm:$0xf]
    %v338 = vld [vmem:[%s5 + $0x64] sm:$0xf]
    %v339 = vld [vmem:[%s5 + $0x68] sm:$0xf]
    %v340 = vld [vmem:[%s5 + $0x6c] sm:$0xf]
    %v341 = vld [vmem:[%s5 + $0x70] sm:$0xf]
    %v342 = vld [vmem:[%s5 + $0x74] sm:$0xf]
    %v343 = vld [vmem:[%s5 + $0x78] sm:$0xf]
    %v344 = vld [vmem:[%s5 + $0x7c] sm:$0xf]
    %v345 = vld [vmem:[%s6] sm:$0x1]
    %v347 = vlaneseq
    %v348 = vshrl.u32 %v347, 7
    %v349 = vsub.s32 0, %v348
    %v350 = vrot.slane %v345, %v349
    %v384 = vunpack.c.l.b16 %v313
    %v385 = vunpack.c.l.b16 %v314
    %v386 = vunpack.c.l.b16 %v315
    %v387 = vunpack.c.l.b16 %v316
    %v388 = vunpack.c.l.b16 %v317
    %v389 = vunpack.c.l.b16 %v318
    %v390 = vunpack.c.l.b16 %v319
    %v391 = vunpack.c.l.b16 %v320
    %v392 = vunpack.c.l.b16 %v321
    %v393 = vunpack.c.l.b16 %v322
    %v394 = vunpack.c.l.b16 %v323
    %v395 = vunpack.c.l.b16 %v324
    %v396 = vunpack.c.l.b16 %v325
    %v397 = vunpack.c.l.b16 %v326
    %v398 = vunpack.c.l.b16 %v327
    %v399 = vunpack.c.l.b16 %v328
    %v400 = vunpack.c.l.b16 %v329
    %v401 = vunpack.c.l.b16 %v330
    %v402 = vunpack.c.l.b16 %v331
    %v403 = vunpack.c.l.b16 %v332
    %v404 = vunpack.c.l.b16 %v333
    %v405 = vunpack.c.l.b16 %v334
    %v406 = vunpack.c.l.b16 %v335
    %v407 = vunpack.c.l.b16 %v336
    %v408 = vunpack.c.l.b16 %v337
    %v409 = vunpack.c.l.b16 %v338
    %v410 = vunpack.c.l.b16 %v339
    %v411 = vunpack.c.l.b16 %v340
    %v412 = vunpack.c.l.b16 %v341
    %v413 = vunpack.c.l.b16 %v342
    %v414 = vunpack.c.l.b16 %v343
    %v415 = vunpack.c.l.b16 %v344
    %v416 = vpack.c.b16 %v385, %v384
    %v417 = vpack.c.b16 %v387, %v386
    %v418 = vpack.c.b16 %v389, %v388
    %v419 = vpack.c.b16 %v391, %v390
    %v420 = vpack.c.b16 %v393, %v392
    %v421 = vpack.c.b16 %v395, %v394
    %v422 = vpack.c.b16 %v397, %v396
    %v423 = vpack.c.b16 %v399, %v398
    %v424 = vpack.c.b16 %v401, %v400
    %v425 = vpack.c.b16 %v403, %v402
    %v426 = vpack.c.b16 %v405, %v404
    %v427 = vpack.c.b16 %v407, %v406
    %v428 = vpack.c.b16 %v409, %v408
    %v429 = vpack.c.b16 %v411, %v410
    %v430 = vpack.c.b16 %v413, %v412
    %v431 = vpack.c.b16 %v415, %v414
    %448 = vmatprep.subr.bf16.mxu0 0
    %449 = vmatpush1.bf16.msra.mxu0 %v416
    %450 = vmatprep.subr.bf16.mxu0 0
    %451 = vmatpush1.bf16.msra.mxu0 %v417
    %452 = vmatprep.subr.bf16.mxu0 0
    %453 = vmatpush1.bf16.msra.mxu0 %v418
    %454 = vmatprep.subr.bf16.mxu0 0
    %455 = vmatpush1.bf16.msra.mxu0 %v419
    %456 = vmatprep.subr.bf16.mxu0 0
    %457 = vmatpush1.bf16.msra.mxu0 %v420
    %458 = vmatprep.subr.bf16.mxu0 0
    %459 = vmatpush1.bf16.msra.mxu0 %v421
    %460 = vmatprep.subr.bf16.mxu0 0
    %461 = vmatpush1.bf16.msra.mxu0 %v422
    %462 = vmatprep.subr.bf16.mxu0 0
    %463 = vmatpush1.bf16.msra.mxu0 %v423
    %464 = vmatprep.subr.bf16.mxu0 0
    %465 = vmatpush1.bf16.msra.mxu0 %v424
    %466 = vmatprep.subr.bf16.mxu0 0
    %467 = vmatpush1.bf16.msra.mxu0 %v425
    %468 = vmatprep.subr.bf16.mxu0 0
    %469 = vmatpush1.bf16.msra.mxu0 %v426
    %470 = vmatprep.subr.bf16.mxu0 0
    %471 = vmatpush1.bf16.msra.mxu0 %v427
    %472 = vmatprep.subr.bf16.mxu0 0
    %473 = vmatpush1.bf16.msra.mxu0 %v428
    %474 = vmatprep.subr.bf16.mxu0 0
    %475 = vmatpush1.bf16.msra.mxu0 %v429
    %476 = vmatprep.subr.bf16.mxu0 0
    %477 = vmatpush1.bf16.msra.mxu0 %v430
    %478 = vmatprep.subr.bf16.mxu0 0
    %479 = vmatpush1.bf16.msra.mxu0 %v431
    %480 = vmatprep.mubr.bf16.mxu0 %v312
    %481 = vmatmul.mubr.bf16.gmra.mrb[0].mxu0 %v311
    %v482 = vpop.f32.mrb[0].mxu0
    %v483 = vadd.f32 %v350, %v482
    %v484 = vpop.f32.mrb[0].mxu0
    %v485 = vpop.f32.mrb[0].mxu0
    %v486 = vpop.f32.mrb[0].mxu0
    %487 = vdwg.mxu0
    %vm488 = vcmp.gt.f32.partialorder %v483, 0.0
    %v489 = vmul.f32 %v483, 0.01
    %v490 = vsel %vm488, %v483, %v489
    %v491 = vpack.c.bf16 %v490, %v490
    %v492 = vld [vmem:[%s7] sm:$0xf]
    %v493 = vld [vmem:[%s7 + $0x4] sm:$0xf]
    %v494 = vld [vmem:[%s7 + $0x8] sm:$0xf]
    %v495 = vld [vmem:[%s7 + $0xc] sm:$0xf]
    %v496 = vld [vmem:[%s7 + $0x10] sm:$0xf]
    %v497 = vld [vmem:[%s7 + $0x14] sm:$0xf]
    %v498 = vld [vmem:[%s7 + $0x18] sm:$0xf]
    %v499 = vld [vmem:[%s7 + $0x1c] sm:$0xf]
    %v500 = vld [vmem:[%s7 + $0x20] sm:$0xf]
    %v501 = vld [vmem:[%s7 + $0x24] sm:$0xf]
    %v502 = vld [vmem:[%s7 + $0x28] sm:$0xf]
    %v503 = vld [vmem:[%s7 + $0x2c] sm:$0xf]
    %v504 = vld [vmem:[%s7 + $0x30] sm:$0xf]
    %v505 = vld [vmem:[%s7 + $0x34] sm:$0xf]
    %v506 = vld [vmem:[%s7 + $0x38] sm:$0xf]
    %v507 = vld [vmem:[%s7 + $0x3c] sm:$0xf]
    %v508 = vld [vmem:[%s8] sm:$0x1]
    %v510 = vlaneseq
    %v511 = vshrl.u32 %v510, 7
    %v512 = vsub.s32 0, %v511
    %v513 = vrot.slane %v508, %v512
    %v531 = vunpack.c.l.b16 %v492
    %v532 = vunpack.c.l.b16 %v493
    %v533 = vunpack.c.l.b16 %v494
    %v534 = vunpack.c.l.b16 %v495
    %v535 = vunpack.c.l.b16 %v496
    %v536 = vunpack.c.l.b16 %v497
    %v537 = vunpack.c.l.b16 %v498
    %v538 = vunpack.c.l.b16 %v499
    %v539 = vunpack.c.l.b16 %v500
    %v540 = vunpack.c.l.b16 %v501
    %v541 = vunpack.c.l.b16 %v502
    %v542 = vunpack.c.l.b16 %v503
    %v543 = vunpack.c.l.b16 %v504
    %v544 = vunpack.c.l.b16 %v505
    %v545 = vunpack.c.l.b16 %v506
    %v546 = vunpack.c.l.b16 %v507
    %v547 = vpack.c.b16 %v532, %v531
    %v548 = vpack.c.b16 %v534, %v533
    %v549 = vpack.c.b16 %v536, %v535
    %v550 = vpack.c.b16 %v538, %v537
    %v551 = vpack.c.b16 %v540, %v539
    %v552 = vpack.c.b16 %v542, %v541
    %v553 = vpack.c.b16 %v544, %v543
    %v554 = vpack.c.b16 %v546, %v545
    %563 = vmatprep.subr.bf16.mxu0 0
    %564 = vmatpush1.bf16.msra.mxu0 %v547
    %565 = vmatprep.subr.bf16.mxu0 0
    %566 = vmatpush1.bf16.msra.mxu0 %v548
    %567 = vmatprep.subr.bf16.mxu0 0
    %568 = vmatpush1.bf16.msra.mxu0 %v549
    %569 = vmatprep.subr.bf16.mxu0 0
    %570 = vmatpush1.bf16.msra.mxu0 %v550
    %571 = vmatprep.subr.bf16.mxu0 0
    %572 = vmatpush1.bf16.msra.mxu0 %v551
    %573 = vmatprep.subr.bf16.mxu0 0
    %574 = vmatpush1.bf16.msra.mxu0 %v552
    %575 = vmatprep.subr.bf16.mxu0 0
    %576 = vmatpush1.bf16.msra.mxu0 %v553
    %577 = vmatprep.subr.bf16.mxu0 0
    %578 = vmatpush1.bf16.msra.mxu0 %v554
    %579 = vmatprep.subr.bf16.mxu0 0
    %580 = vmatpush1.bf16.msra.mxu0 0
    %581 = vmatprep.subr.bf16.mxu0 0
    %582 = vmatpush1.bf16.msra.mxu0 0
    %583 = vmatprep.subr.bf16.mxu0 0
    %584 = vmatpush1.bf16.msra.mxu0 0
    %585 = vmatprep.subr.bf16.mxu0 0
    %586 = vmatpush1.bf16.msra.mxu0 0
    %587 = vmatprep.subr.bf16.mxu0 0
    %588 = vmatpush1.bf16.msra.mxu0 0
    %589 = vmatprep.subr.bf16.mxu0 0
    %590 = vmatpush1.bf16.msra.mxu0 0
    %591 = vmatprep.subr.bf16.mxu0 0
    %592 = vmatpush1.bf16.msra.mxu0 0
    %593 = vmatprep.subr.bf16.mxu0 0
    %594 = vmatpush1.bf16.msra.mxu0 0
    %595 = vmatprep.mubr.bf16.mxu0 0
    %596 = vmatmul.mubr.bf16.gmra.mrb[0].mxu0 %v491
    %v597 = vpop.f32.mrb[0].mxu0
    %v598 = vadd.f32 %v513, %v597
    %v599 = vpop.f32.mrb[0].mxu0
    %v600 = vpop.f32.mrb[0].mxu0
    %v601 = vpop.f32.mrb[0].mxu0
    %602 = vdwg.mxu0
    %vm603 = vcmp.gt.f32.partialorder %v598, 0.0
    %v604 = vmul.f32 %v598, 0.01
    %v605 = vsel %vm603, %v598, %v604
    %v606 = vpack.c.bf16 %v605, %v605
    %v607 = vld [vmem:[%s9] sm:$0xf]
    %v608 = vld [vmem:[%s9 + $0x4] sm:$0xf]
    %v609 = vld [vmem:[%s9 + $0x8] sm:$0xf]
    %v610 = vld [vmem:[%s9 + $0xc] sm:$0xf]
    %v611 = vld [vmem:[%s9 + $0x10] sm:$0xf]
    %v612 = vld [vmem:[%s9 + $0x14] sm:$0xf]
    %v613 = vld [vmem:[%s9 + $0x18] sm:$0xf]
    %v614 = vld [vmem:[%s9 + $0x1c] sm:$0xf]
    %v615 = vld [vmem:[%s9 + $0x20] sm:$0xf]
    %v616 = vld [vmem:[%s9 + $0x24] sm:$0xf]
    %v617 = vld [vmem:[%s9 + $0x28] sm:$0xf]
    %v618 = vld [vmem:[%s9 + $0x2c] sm:$0xf]
    %v619 = vld [vmem:[%s9 + $0x30] sm:$0xf]
    %v620 = vld [vmem:[%s9 + $0x34] sm:$0xf]
    %v621 = vld [vmem:[%s9 + $0x38] sm:$0xf]
    %v622 = vld [vmem:[%s9 + $0x3c] sm:$0xf]
    %v623 = vld [vmem:[%s10] sm:$0x1]
    %v625 = vlaneseq
    %v626 = vshrl.u32 %v625, 7
    %v627 = vsub.s32 0, %v626
    %v628 = vrot.slane %v623, %v627
    %v646 = vunpack.c.l.b16 %v607
    %v647 = vunpack.c.l.b16 %v608
    %v648 = vunpack.c.l.b16 %v609
    %v649 = vunpack.c.l.b16 %v610
    %v650 = vunpack.c.l.b16 %v611
    %v651 = vunpack.c.l.b16 %v612
    %v652 = vunpack.c.l.b16 %v613
    %v653 = vunpack.c.l.b16 %v614
    %v654 = vunpack.c.l.b16 %v615
    %v655 = vunpack.c.l.b16 %v616
    %v656 = vunpack.c.l.b16 %v617
    %v657 = vunpack.c.l.b16 %v618
    %v658 = vunpack.c.l.b16 %v619
    %v659 = vunpack.c.l.b16 %v620
    %v660 = vunpack.c.l.b16 %v621
    %v661 = vunpack.c.l.b16 %v622
    %v662 = vpack.c.b16 %v647, %v646
    %v663 = vpack.c.b16 %v649, %v648
    %v664 = vpack.c.b16 %v651, %v650
    %v665 = vpack.c.b16 %v653, %v652
    %v666 = vpack.c.b16 %v655, %v654
    %v667 = vpack.c.b16 %v657, %v656
    %v668 = vpack.c.b16 %v659, %v658
    %v669 = vpack.c.b16 %v661, %v660
    %678 = vmatprep.subr.bf16.mxu0 0
    %679 = vmatpush1.bf16.msra.mxu0 %v662
    %680 = vmatprep.subr.bf16.mxu0 0
    %681 = vmatpush1.bf16.msra.mxu0 %v663
    %682 = vmatprep.subr.bf16.mxu0 0
    %683 = vmatpush1.bf16.msra.mxu0 %v664
    %684 = vmatprep.subr.bf16.mxu0 0
    %685 = vmatpush1.bf16.msra.mxu0 %v665
    %686 = vmatprep.subr.bf16.mxu0 0
    %687 = vmatpush1.bf16.msra.mxu0 %v666
    %688 = vmatprep.subr.bf16.mxu0 0
    %689 = vmatpush1.bf16.msra.mxu0 %v667
    %690 = vmatprep.subr.bf16.mxu0 0
    %691 = vmatpush1.bf16.msra.mxu0 %v668
    %692 = vmatprep.subr.bf16.mxu0 0
    %693 = vmatpush1.bf16.msra.mxu0 %v669
    %694 = vmatprep.subr.bf16.mxu0 0
    %695 = vmatpush1.bf16.msra.mxu0 0
    %696 = vmatprep.subr.bf16.mxu0 0
    %697 = vmatpush1.bf16.msra.mxu0 0
    %698 = vmatprep.subr.bf16.mxu0 0
    %699 = vmatpush1.bf16.msra.mxu0 0
    %700 = vmatprep.subr.bf16.mxu0 0
    %701 = vmatpush1.bf16.msra.mxu0 0
    %702 = vmatprep.subr.bf16.mxu0 0
    %703 = vmatpush1.bf16.msra.mxu0 0
    %704 = vmatprep.subr.bf16.mxu0 0
    %705 = vmatpush1.bf16.msra.mxu0 0
    %706 = vmatprep.subr.bf16.mxu0 0
    %707 = vmatpush1.bf16.msra.mxu0 0
    %708 = vmatprep.subr.bf16.mxu0 0
    %709 = vmatpush1.bf16.msra.mxu0 0
    %710 = vmatprep.mubr.bf16.mxu0 0
    %711 = vmatmul.mubr.bf16.gmra.mrb[0].mxu0 %v606
    %v712 = vpop.f32.mrb[0].mxu0
    %v713 = vadd.f32 %v628, %v712
    %v714 = vpop.f32.mrb[0].mxu0
    %v715 = vpop.f32.mrb[0].mxu0
    %v716 = vpop.f32.mrb[0].mxu0
    %717 = vdwg.mxu0
    %718 = vst [vmem:[#allocation2] sm:$0xff] %v713
    // Predicated region
    $region46: #{language_net_forward.1} parent=1 // pred_check
      _
    $region47: #{language_net_forward.1} parent=1 // pred_check_branch
      %720 = sbr.rel (0) target = $region49
    $region48: #{language_net_forward.1} parent=1 // pred_region
      %s722 = ssub.s32 128, 128
      %723 = vsyncadd [#allocation3], %s722
      %s725 = sshll.u32 [#allocation2], 4
      %s726 = int_to_ptr.vmem [resolvable:$true] %s725
      %728 = dma.vmem_to_hbm [thread:$0]  %s726, 128, %s11, [#allocation3]
    $region49: #{language_net_forward.1} parent=1 // pred_fallthru
      _
    // Predicated region
    $region50: #{language_net_forward.1} parent=1 // pred_check
      _
    $region51: #{language_net_forward.1} parent=1 // pred_check_branch
      %730 = sbr.rel (0) target = $region53
    $region52: #{language_net_forward.1} parent=1 // pred_region
      %731 = dma.done [#allocation3], 128
    $region53: #{language_net_forward.1} parent=1 // pred_fallthru
      _
    %732 = vsyncpa [#allocation3], 1

</llo_original>
